<compile_context>
chip_gen: v5e
topology: v5e:2x2
jax: 0.10.0
libtpu: 0.0.40
codegen_flags: <defaults>
</compile_context>

<pallas_src>
import math
import functools

import jax
import jax.numpy as jnp
from jax.experimental import pallas as pl
from jax.experimental.pallas import tpu as pltpu


def _build_positional_encoding(d_model: int, max_len: int) -> jnp.ndarray:
    """Deterministic sinusoidal PE buffer, identical to the PyTorch __init__."""
    position = jnp.arange(0, max_len, dtype=jnp.float32)[:, None]          # (L, 1)
    div_term = jnp.exp(
        jnp.arange(0, d_model, 2, dtype=jnp.float32) * (-math.log(10000.0) / d_model)
    )                                                                       # (D/2,)
    pe = jnp.zeros((max_len, d_model), dtype=jnp.float32)
    pe = pe.at[:, 0::2].set(jnp.sin(position * div_term))
    pe = pe.at[:, 1::2].set(jnp.cos(position * div_term))
    return pe[None, :, :]                                                   # (1, L, D)


def _pick_seq_tile(S: int, D: int, itemsize: int,
                   vmem_budget_bytes: int = 20 * 1024 * 1024) -> int:
    """Largest seq-tile TS that divides S, is a multiple of 8, and keeps
    ~6 live double-buffered (TS, D) tiles (tokens, PE, out) under budget."""
    bytes_per_row = D * max(itemsize, 4)        # PE rows + f32 compute dominate
    max_ts = max(8, vmem_budget_bytes // (6 * bytes_per_row))
    if S <= max_ts:
        return S
    # largest multiple-of-8 divisor of S under the budget
    start = (int(max_ts) // 8) * 8
    for cand in range(start, 7, -8):
        if S % cand == 0:
            return cand
    # no aligned divisor under budget: largest multiple-of-8 divisor at all
    for cand in range(((S - 1) // 8) * 8, 7, -8):
        if S % cand == 0:
            return cand
    return S                                    # fully un-tileable; use full S


def _pe_dropout_kernel(seed_ref, x_ref, pe_ref, o_ref, *,
                       dropout_p: float, training: bool):
    # x_ref / pe_ref / o_ref blocks are (1, TS, D)
    y = x_ref[...].astype(jnp.float32) + pe_ref[...].astype(jnp.float32)

    if training and dropout_p > 0.0:
        keep_prob = 1.0 - dropout_p
        shape = y.shape                                   # (1, TS, D), static
        n_elems = shape[1] * shape[2]

        # Flattened block id -> distinct deterministic stream per (seq-tile, batch).
        blk = pl.program_id(0) * pl.num_programs(1) + pl.program_id(1)

        # Unique-ish 32-bit counter per element, then splitmix32-style avalanche.
        row = jax.lax.broadcasted_iota(jnp.int32, shape, 1)
        col = jax.lax.broadcasted_iota(jnp.int32, shape, 2)
        local = (row * shape[2] + col).astype(jnp.uint32)
        base = (blk.astype(jnp.uint32) * jnp.uint32(n_elems)
                + seed_ref[0].astype(jnp.uint32) * jnp.uint32(0x9E3779B9))
        x = local + base
        x = (x ^ (x >> 16)) * jnp.uint32(0x7FEB352D)
        x = (x ^ (x >> 15)) * jnp.uint32(0x846CA68B)
        bits = x ^ (x >> 16)

        # keep-test directly on the uint32 bits: P(bits < thr) = keep_prob
        thr = jnp.uint32(min(int(round(keep_prob * 2.0 ** 32)), 2 ** 32 - 1))
        keep = bits < thr
        y = jnp.where(keep, y * jnp.float32(1.0 / keep_prob), 0.0)

    o_ref[...] = y.astype(o_ref.dtype)


def positional_encoding_forward(tokens: jnp.ndarray,
                                pe_buffer: jnp.ndarray,
                                *,
                                dropout_p: float = 0.1,
                                training: bool = True,
                                seed: int = 0) -> jnp.ndarray:
    """tokens: (B, S, D); pe_buffer: (1, max_len, D) float32."""
    B, S, D = tokens.shape
    assert pe_buffer.ndim == 3 and pe_buffer.shape[0] == 1
    assert pe_buffer.shape[2] == D and pe_buffer.shape[1] >= S

    itemsize = jnp.dtype(tokens.dtype).itemsize
    TS = _pick_seq_tile(S, D, itemsize)

    pe_in = pe_buffer
    if TS % 8 != 0:
        # Unaligned TS is only ever TS == S; make PE's seq dim equal the block
        # dim so the (8,128) rule is satisfied via the full-dim exemption.
        pe_in = pe_buffer[:, :S, :]

    n_s = S // TS
    seed_arr = jnp.array([seed], dtype=jnp.int32)
    kernel = functools.partial(_pe_dropout_kernel,
                               dropout_p=float(dropout_p),
                               training=bool(training))

    return pl.pallas_call(
        kernel,
        out_shape=jax.ShapeDtypeStruct((B, S, D), tokens.dtype),
        grid_spec=pltpu.PrefetchScalarGridSpec(
            num_scalar_prefetch=1,                 # seed lands in SMEM
            grid=(n_s, B),                         # batch innermost: PE block index
            in_specs=[                             # repeats -> its DMA is skipped
                pl.BlockSpec((1, TS, D), lambda s, b, seed: (b, s, 0)),   # tokens
                pl.BlockSpec((1, TS, D), lambda s, b, seed: (0, s, 0)),   # PE (shared)
            ],
            out_specs=pl.BlockSpec((1, TS, D), lambda s, b, seed: (b, s, 0)),
        ),
        compiler_params=pltpu.CompilerParams(
            # Pure functional per-block hashing -> order independent; lets v7x
            # shard grid steps across both TensorCores (no-op on v5e/v6e).
            dimension_semantics=("parallel", "parallel"),
        ),
    )(seed_arr, tokens, pe_in)


if __name__ == "__main__":
    # Small shapes consistent with the module (d_model / max_len scaled down,
    # D kept a multiple of 128 for clean lane layout).
    B, S, D, MAX_LEN = 2, 8, 128, 16
    DROPOUT_P = 0.1

    key = jax.random.PRNGKey(0)
    tokens = jax.random.normal(key, (B, S, D), dtype=jnp.float32)

    pe_buffer = _build_positional_encoding(D, MAX_LEN)                  # (1, 16, 128)
    ref = tokens + pe_buffer[:, :S, :]

    # 1) Eval mode (no dropout): exact match against the deterministic reference.
    out_eval = positional_encoding_forward(tokens, pe_buffer,
                                           dropout_p=DROPOUT_P,
                                           training=False, seed=0)
    out_eval = jax.block_until_ready(out_eval)
    assert out_eval.shape == (B, S, D)
    assert jnp.allclose(out_eval, ref, atol=1e-5)

    # 2) Training mode: dropped elements are exactly 0, kept elements equal
    #    (x + pe) / (1 - p).  (out != 0 as "kept" is a weak but adequate check.)
    out = positional_encoding_forward(tokens, pe_buffer,
                                      dropout_p=DROPOUT_P,
                                      training=True, seed=0)
    out = jax.block_until_ready(out)
    kept = out != 0.0
    assert out.shape == (B, S, D)
    assert jnp.allclose(jnp.where(kept, out, 0.0),
                        jnp.where(kept, ref / (1.0 - DROPOUT_P), 0.0),
                        atol=1e-5)
    keep_frac = jnp.mean(kept.astype(jnp.float32))
    assert 0.75 < float(keep_frac) <= 1.0          # roughly keep_prob = 0.9

    print("KERNEL_OK")
</pallas_src>

<mosaic_0001>
module attributes {stable_mosaic.version = 11 : i64} {
  func.func @_pe_dropout_kernel(%arg0: i32, %arg1: i32, %arg2: memref<1xi32, #tpu.memory_space<smem>>, %arg3: memref<1x8x128xf32, #tpu.memory_space<vmem>>, %arg4: memref<1x8x128xf32, #tpu.memory_space<vmem>>, %arg5: memref<1x8x128xf32, #tpu.memory_space<vmem>>) attributes {dimension_semantics = [#tpu.dimension_semantics<parallel>, #tpu.dimension_semantics<parallel>], iteration_bounds = array<i64: 1, 2>, scalar_prefetch = 1 : i64, scratch_operands = 0 : i64, tpu.core_type = #tpu.core_type<tc>, window_params = [{transform_indices = @transform_0, window_bounds = array<i64: 1, 8, 128>}, {transform_indices = @transform_1, window_bounds = array<i64: 1, 8, 128>}, {transform_indices = @transform_2, window_bounds = array<i64: 1, 8, 128>}]} {
    %c0 = arith.constant 0 : index
    %c0_0 = arith.constant 0 : index
    %c0_1 = arith.constant 0 : index
    %0 = vector.load %arg3[%c0, %c0_0, %c0_1] : memref<1x8x128xf32, #tpu.memory_space<vmem>>, vector<1x8x128xf32>
    %c0_2 = arith.constant 0 : index
    %c0_3 = arith.constant 0 : index
    %c0_4 = arith.constant 0 : index
    %1 = vector.load %arg4[%c0_2, %c0_3, %c0_4] : memref<1x8x128xf32, #tpu.memory_space<vmem>>, vector<1x8x128xf32>
    %2 = arith.addf %0, %1 : vector<1x8x128xf32>
    %c0_5 = arith.constant 0 : index
    %c0_6 = arith.constant 0 : index
    %c0_7 = arith.constant 0 : index
    %3 = vector.load %arg5[%c0_5, %c0_6, %c0_7] : memref<1x8x128xf32, #tpu.memory_space<vmem>>, vector<1x8x128xf32>
    tpu.vector_store %arg5[%c0_5, %c0_6, %c0_7], %2 {strides = array<i32>} : memref<1x8x128xf32, #tpu.memory_space<vmem>>, vector<1x8x128xf32>,
    return
  }
  func.func @transform_0(%arg0: i32, %arg1: i32, %arg2: memref<1xi32, #tpu.memory_space<smem>>) -> (i32, i32, i32) {
    %c0_i32 = arith.constant 0 : i32
    %c0_i32_0 = arith.constant 0 : i32
    return %arg1, %arg0, %c0_i32 : i32, i32, i32
  }
  func.func @transform_1(%arg0: i32, %arg1: i32, %arg2: memref<1xi32, #tpu.memory_space<smem>>) -> (i32, i32, i32) {
    %c0_i32 = arith.constant 0 : i32
    %c0_i32_0 = arith.constant 0 : i32
    %c0_i32_1 = arith.constant 0 : i32
    return %c0_i32, %arg0, %c0_i32_0 : i32, i32, i32
  }
  func.func @transform_2(%arg0: i32, %arg1: i32, %arg2: memref<1xi32, #tpu.memory_space<smem>>) -> (i32, i32, i32) {
    %c0_i32 = arith.constant 0 : i32
    %c0_i32_0 = arith.constant 0 : i32
    return %arg1, %arg0, %c0_i32 : i32, i32, i32
  }
}

</mosaic_0001>

<llo_original>
// kernel: tpu_custom_call.1
$region0: #{tpu_custom_call.1}
  #allocation0 [shape = 'u32[]', space=smem, size = 0x4, offset = 0x4, fixed_abs, tag = 'smem constant byte address 0x4 - core index']
  #allocation1 [shape = 'u32[72,128]{1,0:T(1,128)}', space=vmem, size = 0x9000, scoped, tag = 'internal scratch']
  #allocation2 [shape = 's32[1]{0}', space=sflag, size = 0x4, scoped, tag = 'scoped memory for tpu_custom_call.1']
  #allocation3 [shape = 's32[1]{0:T(128)S(6)}', space=smem, size = 0x200, scoped, tag = 'prefetched SMEM operand 0']
  %s0 = inlined_call_operand.<no memory space> [shape: s32[1], index: 0, kind: input, shape index: {}]
  %s1 = inlined_call_operand.hbm [shape: f32[2,8,128], index: 1, kind: input, shape index: {}]
  %s2 = inlined_call_operand.hbm [shape: f32[1,16,128], index: 2, kind: input, shape index: {}]
  %s3 = inlined_call_operand.hbm [shape: f32[2,8,128], index: 3, kind: output, shape index: {}]
  %s4 = sld [smem:[#allocation0]]
  $region49: #{tpu_custom_call.1} parent=0
    _
  %s6 = ssub.s32 1, %s4
  %s7 = scalar_select 0, %s6, %s4
  %8 = sst [smem:[#allocation3]] %s0
  $region1: #{tpu_custom_call.1} parent=0
    #allocation4 [shape = 'u8[8192]{0}', space=vmem, size = 0x2000, scoped, tag = 'input window, operand 1']
    #allocation5 [shape = 's32[2]{0}', space=sflag, size = 0x8, scoped, tag = 'scoped memory for tpu_custom_call.1']
    #allocation6 [shape = 's32[2]{0}', space=sflag, size = 0x8, scoped, tag = 'scoped memory for tpu_custom_call.1']
    #allocation7 [shape = 'u8[4096]{0}', space=vmem, size = 0x1000, scoped, tag = 'input window, operand 2, single buffered']
    #allocation8 [shape = 's32[1]{0}', space=sflag, size = 0x4, scoped, tag = 'scoped memory for tpu_custom_call.1']
    #allocation9 [shape = 'u8[8192]{0}', space=vmem, size = 0x2000, scoped, tag = 'output window, operand 0']
    %9 = vsyncpa [#allocation5], 0
    %s10 = scalar_lea.sflag [#allocation5], 1
    %11 = vsyncpa %s10, 0
    %12 = vsyncpa [#allocation8], 0
    %13 = vsyncpa [#allocation6], 0
    %s14 = scalar_lea.sflag [#allocation6], 1
    %15 = vsyncpa %s14, 0
    loop: start=0, step=1, limit=4
    $region2: #{tpu_custom_call.1} parent=1 // loop_pre_header
      _
    $region3: #{tpu_custom_call.1} parent=1 // loop_header
      %s17 = sphi 0, %s21
      %p18 = scmp.ge.s32.totalorder %s17, 4
      %s24 = sphi 0, %s36
      %s25 = sphi 0, %s32
      %s26 = sphi 0, %s24
      %s27 = sphi 0, %s25
      %s28 = sphi 0, %s26
      %s29 = sphi 0, %s27
      %s41 = sphi 0, %s43
      %s44 = sphi 0, %s41
      %s45 = sphi 0, %s44
      %s61 = sphi 0, %s45
      %s67 = sphi 0, %s69
      %s70 = sphi 0, %s67
      %s71 = sphi 0, %s70
      %s87 = sphi 0, %s71
      %s95 = sphi 0, %s97
      %s98 = sphi 0, %s95
      %s99 = sphi 0, %s98
      %s115 = sphi 0, %s99
    $region4: #{tpu_custom_call.1} parent=1 // loop_header_branch
      %20 = sbr.rel (%p18) target = $region8
    $region5: #{tpu_custom_call.1} parent=1 // loop_body
      %s22 = ssub.s32 %s17, 1
      %s23 = ssub.s32 %s17, 2
      %s30 = sadd.s32 1, %s25
      %p31 = scmp.ge.s32.totalorder %s30, 2
      %s32 = scalar_select %p31, 0, %s30
      %s33 = sadd.s32 1, %s24
      %s34 = scalar_select %p31, %s33, %s24
      %p35 = scmp.ge.s32.totalorder %s34, 1
      %s36 = scalar_select %p35, 0, %s34
      %s37 = ssub.s32 %s25, %s32
      %s38 = ssub.s32 %s24, %s36
      %s39 = sor.u32 %s37, %s38
      %p40 = scmp.eq.s32.totalorder %s39, 0
      %s42 = sadd.s32 %s41, 1
      %s43 = scalar_select %p40, %s41, %s42
      %p46 = pneg %p40
      %p47 = scmp.eq.s32.totalorder %s17, 1
      %p48 = por %p46, %p47
      %p49 = scmp.ne.s32.totalorder %s41, %s44
      %p50 = scmp.eq.s32.totalorder %s17, 0
      %p51 = por %p49, %p50
      %p52 = scmp.ne.s32.totalorder %s41, %s44
      %p53 = scmp.eq.s32.totalorder %s22, 1
      %p54 = por %p52, %p53
      %p55 = scmp.ne.s32.totalorder %s44, %s45
      %p56 = scmp.eq.s32.totalorder %s22, 0
      %p57 = por %p55, %p56
      %p58 = scmp.ne.s32.totalorder %s44, %s45
      %p59 = scmp.eq.s32.totalorder %s23, 1
      %p60 = por %p58, %p59
      %p62 = scmp.ne.s32.totalorder %s45, %s61
      %p63 = scmp.eq.s32.totalorder %s23, 0
      %p64 = por %p62, %p63
      %s65 = ssub.s32 %s24, %s36
      %p66 = scmp.eq.s32.totalorder %s65, 0
      %s68 = sadd.s32 %s67, 1
      %s69 = scalar_select %p66, %s67, %s68
      %p72 = pneg %p66
      %p73 = scmp.eq.s32.totalorder %s17, 1
      %p74 = por %p72, %p73
      %p75 = scmp.ne.s32.totalorder %s67, %s70
      %p76 = scmp.eq.s32.totalorder %s17, 0
      %p77 = por %p75, %p76
      %p78 = scmp.ne.s32.totalorder %s67, %s70
      %p79 = scmp.eq.s32.totalorder %s22, 1
      %p80 = por %p78, %p79
      %p81 = scmp.ne.s32.totalorder %s70, %s71
      %p82 = scmp.eq.s32.totalorder %s22, 0
      %p83 = por %p81, %p82
      %p84 = scmp.ne.s32.totalorder %s70, %s71
      %p85 = scmp.eq.s32.totalorder %s23, 1
      %p86 = por %p84, %p85
      %p88 = scmp.ne.s32.totalorder %s71, %s87
      %p89 = scmp.eq.s32.totalorder %s23, 0
      %p90 = por %p88, %p89
      %s91 = ssub.s32 %s25, %s32
      %s92 = ssub.s32 %s24, %s36
      %s93 = sor.u32 %s91, %s92
      %p94 = scmp.eq.s32.totalorder %s93, 0
      %s96 = sadd.s32 %s95, 1
      %s97 = scalar_select %p94, %s95, %s96
      %p100 = pneg %p94
      %p101 = scmp.eq.s32.totalorder %s17, 1
      %p102 = por %p100, %p101
      %p103 = scmp.ne.s32.totalorder %s95, %s98
      %p104 = scmp.eq.s32.totalorder %s17, 0
      %p105 = por %p103, %p104
      %p106 = scmp.ne.s32.totalorder %s95, %s98
      %p107 = scmp.eq.s32.totalorder %s22, 1
      %p108 = por %p106, %p107
      %p109 = scmp.ne.s32.totalorder %s98, %s99
      %p110 = scmp.eq.s32.totalorder %s22, 0
      %p111 = por %p109, %p110
      %p112 = scmp.ne.s32.totalorder %s98, %s99
      %p113 = scmp.eq.s32.totalorder %s23, 1
      %p114 = por %p112, %p113
      %p116 = scmp.ne.s32.totalorder %s99, %s115
      %p117 = scmp.eq.s32.totalorder %s23, 0
      %p118 = por %p116, %p117
      %p119 = scmp.le.s32.totalorder 1, %s17
      %p120 = scmp.lt.s32.totalorder %s17, 3
      %p121 = pnand %p119, %p120
      %p122 = pneg %p121
      // Predicated region
      $region9: #{tpu_custom_call.1} parent=5 // pred_check
        _
      $region10: #{tpu_custom_call.1} parent=5 // pred_check_branch
        %124 = sbr.rel (%p121) target = $region12
      $region11: #{tpu_custom_call.1} parent=5 // pred_region
        %s125 = ssub.s32 %s17, 1
        // Predicated region
        $region13: #{tpu_custom_call.1} parent=11 // pred_check
          %p126 = pneg %p83
        $region14: #{tpu_custom_call.1} parent=11 // pred_check_branch
          %128 = sbr.rel (%p126) target = $region16
        $region15: #{tpu_custom_call.1} parent=11 // pred_region
          %130 = vsyncadd [#allocation8], 0
          %s131 = smul.addr %s26, 8
          %s132 = scalar_lea.hbm %s2, %s131
          %s134 = sshll.u32 %s132, 4
          %s135 = int_to_ptr.hbm [resolvable:$true] %s134
          %s136 = sshll.u32 [#allocation7], 4
          %s137 = int_to_ptr.vmem [resolvable:$true] %s136
          %139 = dma.hbm_to_vmem [thread:$0]  %s135, 128, %s137, [#allocation8]
        $region16: #{tpu_custom_call.1} parent=11 // pred_fallthru
          _
      $region12: #{tpu_custom_call.1} parent=5 // pred_fallthru
        _
      %p140 = scmp.lt.s32.totalorder %s17, 2
      // Predicated region
      $region17: #{tpu_custom_call.1} parent=5 // pred_check
        %p141 = pneg %p140
      $region18: #{tpu_custom_call.1} parent=5 // pred_check_branch
        %143 = sbr.rel (%p141) target = $region20
      $region19: #{tpu_custom_call.1} parent=5 // pred_region
        // Predicated region
        $region21: #{tpu_custom_call.1} parent=19 // pred_check
          %p144 = pneg %p51
        $region22: #{tpu_custom_call.1} parent=19 // pred_check_branch
          %146 = sbr.rel (%p144) target = $region24
        $region23: #{tpu_custom_call.1} parent=19 // pred_region
          %s147 = sand.u32 %s41, 1
          %s148 = scalar_lea.sflag [#allocation5], %s147
          %s149 = sand.u32 %s41, 1
          %s150 = smul.addr %s149, 8
          %s151 = scalar_lea.vmem [#allocation4], %s150
          %153 = vsyncadd %s148, 0
          %s154 = sadd.s32 %s24, %s25
          %s155 = smul.addr %s154, 8
          %s156 = scalar_lea.hbm %s1, %s155
          %s158 = sshll.u32 %s156, 4
          %s159 = int_to_ptr.hbm [resolvable:$true] %s158
          %s160 = sshll.u32 %s151, 4
          %s161 = int_to_ptr.vmem [resolvable:$true] %s160
          %163 = dma.hbm_to_vmem [thread:$0]  %s159, 128, %s161, %s148
        $region24: #{tpu_custom_call.1} parent=19 // pred_fallthru
          _
      $region20: #{tpu_custom_call.1} parent=5 // pred_fallthru
        _
      %p164 = scmp.le.s32.totalorder 1, %s17
      %p165 = scmp.lt.s32.totalorder %s17, 3
      %p166 = pnand %p164, %p165
      %p167 = pneg %p166
      // Predicated region
      $region25: #{tpu_custom_call.1} parent=5 // pred_check
        _
      $region26: #{tpu_custom_call.1} parent=5 // pred_check_branch
        %169 = sbr.rel (%p166) target = $region28
      $region27: #{tpu_custom_call.1} parent=5 // pred_region
        %s170 = ssub.s32 %s17, 1
        %s171 = sand.u32 %s44, 1
        %s172 = scalar_lea.sflag [#allocation5], %s171
        %s173 = sand.u32 %s44, 1
        %s174 = smul.addr %s173, 8
        %s175 = scalar_lea.vmem [#allocation4], %s174
        // Predicated region
        $region29: #{tpu_custom_call.1} parent=27 // pred_check
          %p176 = pneg %p57
        $region30: #{tpu_custom_call.1} parent=27 // pred_check_branch
          %178 = sbr.rel (%p176) target = $region32
        $region31: #{tpu_custom_call.1} parent=27 // pred_region
          %180 = dma.done %s172, 128
        $region32: #{tpu_custom_call.1} parent=27 // pred_fallthru
          _
        // Predicated region
        $region33: #{tpu_custom_call.1} parent=27 // pred_check
          %p181 = pneg %p83
        $region34: #{tpu_custom_call.1} parent=27 // pred_check_branch
          %183 = sbr.rel (%p181) target = $region36
        $region35: #{tpu_custom_call.1} parent=27 // pred_region
          %185 = dma.done [#allocation8], 128
        $region36: #{tpu_custom_call.1} parent=27 // pred_fallthru
          _
        %s186 = sand.u32 %s44, 1
        %s187 = scalar_lea.sflag [#allocation5], %s186
        %s188 = sand.u32 %s44, 1
        %s189 = smul.addr %s188, 8
        %s190 = scalar_lea.vmem [#allocation4], %s189
        %p191 = pneg %p57
        %p192 = pneg %p54
        %p193 = pneg %p83
        %p194 = pneg %p80
        %p195 = pneg %p111
        %p196 = pneg %p108
        %s197 = sand.u32 %s98, 1
        %s198 = scalar_lea.sflag [#allocation6], %s197
        %s199 = sand.u32 %s98, 1
        %s200 = smul.addr %s199, 8
        %s201 = scalar_lea.vmem [#allocation9], %s200
        %v202 = vld [vmem:[%s175] sm:$0xff]
        %v203 = vld [vmem:[#allocation7] sm:$0xff]
        %v204 = vadd.f32 %v202, %v203
        %205 = vst [vmem:[%s201] sm:$0xff] %v204
        %s206 = sand.u32 %s98, 1
        %s207 = scalar_lea.sflag [#allocation6], %s206
        %s208 = sand.u32 %s98, 1
        %s209 = smul.addr %s208, 8
        %s210 = scalar_lea.vmem [#allocation9], %s209
        // Predicated region
        $region37: #{tpu_custom_call.1} parent=27 // pred_check
          %p211 = pneg %p108
        $region38: #{tpu_custom_call.1} parent=27 // pred_check_branch
          %213 = sbr.rel (%p211) target = $region40
        $region39: #{tpu_custom_call.1} parent=27 // pred_region
          %215 = vsyncadd %s207, 0
          %s216 = sadd.s32 %s26, %s27
          %s217 = smul.addr %s216, 8
          %s218 = scalar_lea.hbm %s3, %s217
          %s220 = sshll.u32 %s210, 4
          %s221 = int_to_ptr.vmem [resolvable:$true] %s220
          %s222 = sshll.u32 %s218, 4
          %s223 = int_to_ptr.hbm [resolvable:$true] %s222
          %225 = dma.vmem_to_hbm [thread:$0]  %s221, 128, %s223, %s207
        $region40: #{tpu_custom_call.1} parent=27 // pred_fallthru
          _
      $region28: #{tpu_custom_call.1} parent=5 // pred_fallthru
        _
      %p226 = scmp.le.s32.totalorder 2, %s17
      // Predicated region
      $region41: #{tpu_custom_call.1} parent=5 // pred_check
        %p227 = pneg %p226
      $region42: #{tpu_custom_call.1} parent=5 // pred_check_branch
        %229 = sbr.rel (%p227) target = $region44
      $region43: #{tpu_custom_call.1} parent=5 // pred_region
        %s230 = ssub.s32 %s17, 2
        // Predicated region
        $region45: #{tpu_custom_call.1} parent=43 // pred_check
          %p231 = pneg %p114
        $region46: #{tpu_custom_call.1} parent=43 // pred_check_branch
          %233 = sbr.rel (%p231) target = $region48
        $region47: #{tpu_custom_call.1} parent=43 // pred_region
          %s234 = sand.u32 %s99, 1
          %s235 = scalar_lea.sflag [#allocation6], %s234
          %s236 = sand.u32 %s99, 1
          %s237 = smul.addr %s236, 8
          %s238 = scalar_lea.vmem [#allocation9], %s237
          %240 = dma.done %s235, 128
        $region48: #{tpu_custom_call.1} parent=43 // pred_fallthru
          _
      $region44: #{tpu_custom_call.1} parent=5 // pred_fallthru
        _
    $region6: #{tpu_custom_call.1} parent=1 // loop_footer
      %s21 = sadd.s32 1, %s17
    $region7: #{tpu_custom_call.1} parent=1 // loop_footer_branch
      %16 = sbr.rel target = $region3
    $region8: #{tpu_custom_call.1} parent=1 // loop_exit
      _
    %241 = vsyncpa [#allocation5], 1
    %s242 = scalar_lea.sflag [#allocation5], 1
    %243 = vsyncpa %s242, 1
    %244 = vsyncpa [#allocation8], 1
    %245 = vsyncpa [#allocation6], 1
    %s246 = scalar_lea.sflag [#allocation6], 1
    %247 = vsyncpa %s246, 1

</llo_original>
